<compile_context>
chip_gen: v7x
topology: tpu7x:2x2x1
jax: 0.10.0
libtpu: 0.0.40
codegen_flags: <defaults>
</compile_context>

<pallas_src>
import jax
import jax.numpy as jnp
from jax.experimental import pallas as pl
from jax.experimental.pallas import tpu as pltpu


# ----------------------------------------------------------------------------
# Kernel bodies
# ----------------------------------------------------------------------------
def _alias_noop_kernel(x_ref, o_ref):
    # Output buffer IS the input buffer (input_output_aliases={0: 0}); the
    # data is already correct.  Just pin the dependency so the aliased output
    # materializes after this call.
    del x_ref
    pltpu.touch(o_ref)


def _dma_copy_kernel(x_ref, o_ref, sem):
    # Single contiguous HBM -> HBM DMA of the whole tensor.
    cp = pltpu.make_async_copy(x_ref, o_ref, sem)
    cp.start()
    cp.wait()


# ----------------------------------------------------------------------------
# pallas_call wrappers
# ----------------------------------------------------------------------------
def _flatten_aliased(x2):
    n, flat = x2.shape
    return pl.pallas_call(
        _alias_noop_kernel,
        out_shape=jax.ShapeDtypeStruct((n, flat), x2.dtype),
        in_specs=[pl.BlockSpec(memory_space=pl.ANY)],
        out_specs=pl.BlockSpec(memory_space=pl.ANY),
        input_output_aliases={0: 0},
        compiler_params=pltpu.CompilerParams(has_side_effects=True),
        cost_estimate=pl.CostEstimate(flops=0, transcendentals=0,
                                      bytes_accessed=0),
    )(x2)


def _flatten_copied(x2):
    n, flat = x2.shape
    nbytes = n * flat * jnp.dtype(x2.dtype).itemsize
    return pl.pallas_call(
        _dma_copy_kernel,
        out_shape=jax.ShapeDtypeStruct((n, flat), x2.dtype),
        in_specs=[pl.BlockSpec(memory_space=pl.ANY)],
        out_specs=pl.BlockSpec(memory_space=pl.ANY),
        scratch_shapes=[pltpu.SemaphoreType.DMA(())],
        cost_estimate=pl.CostEstimate(flops=0, transcendentals=0,
                                      bytes_accessed=2 * nbytes),
    )(x2)


def view_flatten(x, *, force_copy: bool = False):
    """Semantics of torch .view(N, -1) for a contiguous input."""
    n = x.shape[0]
    flat = 1
    for d in x.shape[1:]:
        flat *= d

    # Free metadata reshape at the XLA level -- no data movement here.
    x2 = x.reshape(n, flat)

    if force_copy:
        return _flatten_copied(x2)

    try:
        # Preferred: aliased no-op kernel (zero HBM traffic in the kernel).
        return jax.block_until_ready(_flatten_aliased(x2))
    except Exception:
        # Graceful degradation if the aliased no-op form is rejected by this
        # jax/libtpu build: one whole-tensor HBM->HBM DMA.  Still no VMEM
        # staging and still shape / TPU-generation independent.
        return _flatten_copied(x2)


# ----------------------------------------------------------------------------
# Self-test
# ----------------------------------------------------------------------------
if __name__ == "__main__":
    key = jax.random.PRNGKey(0)

    # Small NCHW feature map, consistent with the ResNet-50 SSHead usage.
    x = jax.random.normal(key, (2, 4, 16, 16), dtype=jnp.float32)
    ref = x.reshape(x.shape[0], -1)  # computed before the kernel call

    out = jax.block_until_ready(view_flatten(x))
    assert out.shape == (2, 4 * 16 * 16)
    assert out.dtype == x.dtype
    assert jnp.array_equal(out, ref)

    # Explicit fresh-buffer path: single HBM->HBM DMA.
    out_copy = jax.block_until_ready(view_flatten(x, force_copy=True))
    assert out_copy.shape == (2, 4 * 16 * 16)
    assert jnp.array_equal(out_copy, ref)

    # Ragged, non-(8,128)-aligned shape: neither path has tiling constraints,
    # so the previous divisibility / VMEM-blow-up concern is structurally gone.
    y = jax.random.normal(jax.random.PRNGKey(1), (3, 5, 7), dtype=jnp.float32)
    ref_y = y.reshape(3, -1)
    out_y = jax.block_until_ready(view_flatten(y))
    assert out_y.shape == (3, 35)
    assert jnp.array_equal(out_y, ref_y)

    print("KERNEL_OK")
</pallas_src>

<mosaic_0001>
module attributes {stable_mosaic.version = 11 : i64} {
  func.func @_alias_noop_kernel(%arg0: memref<2x1024xf32, #tpu.memory_space<any>>, %arg1: memref<2x1024xf32, #tpu.memory_space<any>>) attributes {dimension_semantics = [], scalar_prefetch = 0 : i64, scratch_operands = 0 : i64, tpu.core_type = #tpu.core_type<tc>} {
    return
  }
}

module attributes {stable_mosaic.version = 11 : i64} {
  func.func @_dma_copy_kernel(%arg0: memref<2x1024xf32, #tpu.memory_space<any>>, %arg1: memref<2x1024xf32, #tpu.memory_space<any>>, %arg2: memref<!tpu.dma_semaphore, #tpu.memory_space<semaphore_mem>>) attributes {dimension_semantics = [], scalar_prefetch = 0 : i64, scratch_operands = 1 : i64, tpu.core_type = #tpu.core_type<tc>} {
    tpu.enqueue_dma source(%arg0 : memref<2x1024xf32, #tpu.memory_space<any>>) target(%arg1 : memref<2x1024xf32, #tpu.memory_space<any>>) target_semaphore(%arg2 : memref<!tpu.dma_semaphore, #tpu.memory_space<semaphore_mem>>)
    tpu.wait_dma2 semaphore(%arg2 : memref<!tpu.dma_semaphore, #tpu.memory_space<semaphore_mem>>) src(%arg0 : memref<2x1024xf32, #tpu.memory_space<any>>) dst(%arg1 : memref<2x1024xf32, #tpu.memory_space<any>>)
    return
  }
}

</mosaic_0001>

<llo_original>
// kernel: tpu_custom_call.1
$region0: #{tpu_custom_call.1}
  #allocation0 [shape = 'u32[]', space=smem, size = 0x4, offset = 0x4, fixed_abs, tag = 'smem constant byte address 0x4 - core index']
  #allocation1 [shape = 'u32[144,128]{1,0:T(1,128)}', space=vmem, size = 0x12000, scoped, tag = 'internal scratch']
  %s0 = inlined_call_operand.hbm [shape: f32[2,1024], index: 0, kind: input, shape index: {}, may-alias: {0,1}]
  %s1 = inlined_call_operand.hbm [shape: f32[2,1024], index: 1, kind: output, shape index: {}, may-alias: {0,1}]
  %s2 = sld [smem:[#allocation0]]
  $region2: #{tpu_custom_call.1} parent=0
    _
  %s4 = ssub.s32 1, %s2
  %s5 = scalar_select 0, %s4, %s2

// kernel: tpu_custom_call.1
$region0: #{tpu_custom_call.1}
  #allocation0 [shape = 'u32[]', space=smem, size = 0x4, offset = 0x4, fixed_abs, tag = 'smem constant byte address 0x4 - core index']
  #allocation1 [shape = 'u32[144,128]{1,0:T(1,128)}', space=vmem, size = 0x12000, scoped, tag = 'internal scratch']
  #allocation2 [shape = 's32[1]{0}', space=sflag, size = 0x4, scoped, tag = 'scratch operand']
  #allocation3 [shape = 's32[]', space=sflag, size = 0x4, offset = 0, fixed_abs, tag = 'sflag constant byte address 0x0 - dummy sync flag']
  #allocation4 [shape = 'u32[0]{0}', space=smem, size = 0, offset = 0, fixed_abs, tag = 'smem constant byte address 0x0 - null']
  %s0 = inlined_call_operand.hbm [shape: f32[2,1024], index: 0, kind: input, shape index: {}]
  %s1 = inlined_call_operand.hbm [shape: f32[2,1024], index: 1, kind: output, shape index: {}]
  %s2 = sld [smem:[#allocation0]]
  $region2: #{tpu_custom_call.1} parent=0
    _
  %s4 = ssub.s32 1, %s2
  %s5 = scalar_select 0, %s4, %s2
  %s7 = sshll.u32 1, 14
  %s8 = sxor.u32 4294967295, %s7
  %s11 = sshll.u32 3, 24
  %s12 = sxor.u32 4294967295, %s11
  %s13 = sand.u32 0, %s12
  %s15 = sor.u32 %s13, 0
  %18 = dma.general %s0, 256, %s1, [#allocation2], [#allocation3], [#allocation4], %s15, 0
  %s19 = smul.u32 2, 1
  %s20 = smul.u32 %s19, 8
  %s21 = sshll.u32 %s20, 4
  %22 = dma.done [#allocation2], %s21
  %23 = vsyncmov [#allocation2]
  %s24 = vpop.sfrf %23
  %p25 = scmp.eq.s32.totalorder %s24, 0
  %p26 = pneg %p25
  %28 = shalt.err (%p26)

</llo_original>
